<compile_context>
chip_gen: v7x
topology: tpu7x:2x2x1
jax: 0.10.0
libtpu: 0.0.40
codegen_flags: <defaults>
</compile_context>

<pallas_src>
import math
import jax
import jax.numpy as jnp
from jax.experimental import pallas as pl
from jax.experimental.pallas import tpu as pltpu


def _round_up(x, m):
    return ((x + m - 1) // m) * m


# ---------------------------------------------------------------------------
# Kernel: one lane-dense fused matmul per batch tile.
#   x: [TM, total_dim]  W: [total_dim, N_total]  b: [1, N_total] -> [TM, N_total]
# ---------------------------------------------------------------------------
def _fused_kernel(x_ref, w_ref, b_ref, o_ref):
    # Cast the MXU feed in-kernel (no extra HBM pass); f32 accumulation and
    # f32 bias add; cast only at the output store.
    x = x_ref[...].astype(w_ref.dtype)
    acc = jnp.dot(x, w_ref[...], preferred_element_type=jnp.float32)
    o_ref[...] = (acc + b_ref[...]).astype(o_ref.dtype)


class FilterEmbeddingConfig:
    def __init__(self, n_join_col, n_fanout, n_table, n_filter_col,
                 hist_dim, table_dim, filter_dim, n_embd):
        self.n_join_col = n_join_col
        self.n_fanout = n_fanout
        self.n_table = n_table
        self.n_filter_col = n_filter_col
        self.hist_dim = hist_dim
        self.table_dim = table_dim
        self.filter_dim = filter_dim
        self.n_embd = n_embd

    @property
    def prefix_dim(self):
        return (self.n_join_col + self.n_fanout) * self.hist_dim

    @property
    def total_dim(self):
        return (self.prefix_dim + self.n_table * self.table_dim
                + self.n_filter_col * self.filter_dim)

    @property
    def n_feat(self):
        return self.n_table + self.n_filter_col

    @property
    def n_total(self):
        return self.n_feat * self.n_embd


def init_params(key, cfg):
    """nn.Linear-style init (uniform +/- 1/sqrt(fan_in)); weights stored
    pre-transposed as [in_dim, n_embd]."""
    k1, k2, k3, k4 = jax.random.split(key, 4)
    bt = 1.0 / math.sqrt(cfg.table_dim)
    bf = 1.0 / math.sqrt(cfg.filter_dim)
    return dict(
        w_table=jax.random.uniform(k1, (cfg.table_dim, cfg.n_embd),
                                   jnp.float32, -bt, bt),
        b_table=jax.random.uniform(k2, (cfg.n_embd,), jnp.float32, -bt, bt),
        w_filter=jax.random.uniform(k3, (cfg.filter_dim, cfg.n_embd),
                                    jnp.float32, -bf, bf),
        b_filter=jax.random.uniform(k4, (cfg.n_embd,), jnp.float32, -bf, bf),
    )


def fuse_params(params, cfg, compute_dtype=jnp.float32):
    """Block-diagonal fused weight [total_dim, N_total] (zero rows for the
    join/fanout histogram prefix) + fused bias [1, N_total] (kept f32)."""
    prefix = cfg.prefix_dim
    k_table = cfg.n_table * cfg.table_dim
    w = jnp.zeros((cfg.total_dim, cfg.n_total), jnp.float32)
    for i in range(cfg.n_table):
        r0 = prefix + i * cfg.table_dim
        c0 = i * cfg.n_embd
        w = w.at[r0:r0 + cfg.table_dim, c0:c0 + cfg.n_embd].set(params["w_table"])
    for j in range(cfg.n_filter_col):
        r0 = prefix + k_table + j * cfg.filter_dim
        c0 = (cfg.n_table + j) * cfg.n_embd
        w = w.at[r0:r0 + cfg.filter_dim, c0:c0 + cfg.n_embd].set(params["w_filter"])

    b = jnp.concatenate(
        [jnp.tile(params["b_table"], (cfg.n_table,)),
         jnp.tile(params["b_filter"], (cfg.n_filter_col,))]
    ).reshape(1, cfg.n_total)
    return {"w_fused": w.astype(compute_dtype), "b_fused": b}


def filter_embedding_forward(x, fused, cfg, *, tm=2048,
                             out_dtype=jnp.float32,
                             vmem_budget_bytes=10 * 1024 * 1024,
                             return_2d=False):
    """x: [B, total_dim] -> [B, n_feat, n_embd] (or [B, N_total] if return_2d).

    tm: requested batch tile (rounded to a multiple of 8, clamped against a
        VMEM budget sized for v7x's smaller scoped VMEM).
    out_dtype: f32 (exact) or bf16 (halves the dominant output HBM stream).
    """
    B, total_dim = x.shape
    n_feat, n_total = cfg.n_feat, cfg.n_total
    w_fused, b_fused = fused["w_fused"], fused["b_fused"]
    assert w_fused.shape == (total_dim, n_total), (w_fused.shape, total_dim, n_total)

    in_b = x.dtype.itemsize
    out_b = jnp.dtype(out_dtype).itemsize
    w_b = w_fused.dtype.itemsize

    # Clamp the tile so double-buffered in/out blocks + the f32 acc temp fit
    # the budget (keeps us under the default scoped VMEM on v5e/v6e/v7x).
    per_row = 2 * total_dim * in_b + 2 * n_total * out_b + n_total * 4
    tm_cap = max(8, (vmem_budget_bytes // per_row) // 8 * 8)

    m_aligned = _round_up(B, 8)
    tm_eff = max(8, min(_round_up(tm, 8), tm_cap, m_aligned))
    # v7x megacore: for large batches keep >= 2 grid steps so "parallel" can
    # shard steps across both TensorCores (no-op on single-TC v5e/v6e).
    if m_aligned >= 512 and pl.cdiv(B, tm_eff) < 2:
        tm_eff = _round_up(pl.cdiv(m_aligned, 2), 8)
    grid = (pl.cdiv(B, tm_eff),)

    w_bytes = total_dim * n_total * w_b
    cost = pl.CostEstimate(
        flops=2 * B * total_dim * n_total,
        transcendentals=0,
        bytes_accessed=(B * total_dim * in_b + w_bytes + n_total * 4
                        + B * n_total * out_b),
    )

    # Generous scoped-VMEM estimate (double-buffered x/out/W + f32 acc temp).
    vmem_est = (2 * tm_eff * total_dim * in_b
                + 2 * tm_eff * n_total * out_b
                + tm_eff * n_total * 4
                + 2 * w_bytes + 2 * n_total * 4)
    vmem_limit = int(min(max(vmem_est + (2 << 20), 16 << 20), 48 << 20))

    out2d = pl.pallas_call(
        _fused_kernel,
        out_shape=jax.ShapeDtypeStruct((B, n_total), out_dtype),
        grid=grid,
        in_specs=[
            pl.BlockSpec((tm_eff, total_dim), lambda i: (i, 0)),
            pl.BlockSpec((total_dim, n_total), lambda i: (0, 0)),  # VMEM-resident
            pl.BlockSpec((1, n_total), lambda i: (0, 0)),          # VMEM-resident
        ],
        out_specs=pl.BlockSpec((tm_eff, n_total), lambda i: (i, 0)),
        compiler_params=pltpu.CompilerParams(
            dimension_semantics=("parallel",),
            vmem_limit_bytes=vmem_limit),
        cost_estimate=cost,
    )(x, w_fused, b_fused)

    if return_2d:
        return out2d  # lane-dense [B, N_total]; reshape is the consumer's call
    return out2d.reshape(B, n_feat, cfg.n_embd)


def reference_forward(x, params, cfg):
    """Pure-JAX reference mirroring the PyTorch per-slice loop."""
    outs = []
    bias = cfg.prefix_dim
    for i in range(cfg.n_table):
        sl = x[:, bias + i * cfg.table_dim: bias + (i + 1) * cfg.table_dim]
        outs.append(sl @ params["w_table"] + params["b_table"])
    bias = bias + cfg.n_table * cfg.table_dim
    for i in range(cfg.n_filter_col):
        sl = x[:, bias + i * cfg.filter_dim: bias + (i + 1) * cfg.filter_dim]
        outs.append(sl @ params["w_filter"] + params["b_filter"])
    return jnp.stack(outs, axis=1)


if __name__ == "__main__":
    cfg = FilterEmbeddingConfig(
        n_join_col=2, n_fanout=2, n_table=3, n_filter_col=4,
        hist_dim=4, table_dim=8, filter_dim=6, n_embd=32,
    )

    key = jax.random.PRNGKey(0)
    kx, kx2, kp = jax.random.split(key, 3)
    params = init_params(kp, cfg)
    fused_f32 = fuse_params(params, cfg)                       # f32 MXU feed
    fused_bf16 = fuse_params(params, cfg, jnp.bfloat16)        # bf16 MXU feed

    # --- test 1: tiny batch (B=2), single grid step, ragged (B < 8) block ---
    B = 2
    x = jax.random.normal(kx, (B, cfg.total_dim), jnp.float32)
    out = jax.block_until_ready(filter_embedding_forward(x, fused_f32, cfg))
    ref = reference_forward(x, params, cfg)
    assert out.shape == (B, cfg.n_feat, cfg.n_embd), out.shape
    assert jnp.allclose(out, ref, atol=2e-5, rtol=2e-5), "f32 mismatch (B=2)"

    # --- test 2: batch not a multiple of the tile -> multi-step grid with a
    #             ragged last block (no host-side padding pass) -------------
    B2 = 37
    x2 = jax.random.normal(kx2, (B2, cfg.total_dim), jnp.float32)
    out2 = jax.block_until_ready(
        filter_embedding_forward(x2, fused_f32, cfg, tm=16))
    ref2 = reference_forward(x2, params, cfg)
    assert out2.shape == (B2, cfg.n_feat, cfg.n_embd)
    assert jnp.allclose(out2, ref2, atol=2e-5, rtol=2e-5), "f32 mismatch (B=37)"

    # --- test 3: bf16 MXU feed + bf16 output (memory-bound fast path) -------
    out3 = jax.block_until_ready(
        filter_embedding_forward(x2, fused_bf16, cfg, tm=16,
                                 out_dtype=jnp.bfloat16))
    assert out3.dtype == jnp.bfloat16
    assert jnp.allclose(out3.astype(jnp.float32), ref2,
                        atol=5e-2, rtol=5e-2), "bf16 mismatch"

    # --- test 4: lane-dense 2D output path ----------------------------------
    out4 = jax.block_until_ready(
        filter_embedding_forward(x2, fused_f32, cfg, tm=16, return_2d=True))
    assert out4.shape == (B2, cfg.n_total)
    assert jnp.allclose(out4.reshape(B2, cfg.n_feat, cfg.n_embd), ref2,
                        atol=2e-5, rtol=2e-5), "2D path mismatch"

    print("KERNEL_OK")
</pallas_src>

<mosaic_0001>
module attributes {stable_mosaic.version = 11 : i64} {
  func.func @_fused_kernel(%arg0: i32, %arg1: memref<8x64xf32, #tpu.memory_space<vmem>>, %arg2: memref<64x224xf32, #tpu.memory_space<vmem>>, %arg3: memref<1x224xf32, #tpu.memory_space<vmem>>, %arg4: memref<8x224xf32, #tpu.memory_space<vmem>>) attributes {dimension_semantics = [#tpu.dimension_semantics<parallel>], iteration_bounds = array<i64: 1>, scalar_prefetch = 0 : i64, scratch_operands = 0 : i64, tpu.core_type = #tpu.core_type<tc>, window_params = [{transform_indices = @transform_0, window_bounds = array<i64: 8, 64>}, {pipeline_mode = #tpu.pipeline_mode<synchronous>, transform_indices = @transform_1, window_bounds = array<i64: 64, 224>}, {pipeline_mode = #tpu.pipeline_mode<synchronous>, transform_indices = @transform_2, window_bounds = array<i64: 1, 224>}, {transform_indices = @transform_3, window_bounds = array<i64: 8, 224>}]} {
    %c0 = arith.constant 0 : index
    %c0_0 = arith.constant 0 : index
    %0 = vector.load %arg1[%c0, %c0_0] : memref<8x64xf32, #tpu.memory_space<vmem>>, vector<8x64xf32>
    %c0_1 = arith.constant 0 : index
    %c0_2 = arith.constant 0 : index
    %1 = vector.load %arg2[%c0_1, %c0_2] : memref<64x224xf32, #tpu.memory_space<vmem>>, vector<64x224xf32>
    %cst = arith.constant dense<0.000000e+00> : vector<8x224xf32>
    %2 = tpu.matmul %0, %1, %cst {dimension_numbers = #tpu.dot_dimension_numbers<[1], [0], [0], [1], [0, 0, 1, 1], [], []>} : vector<8x64xf32>, vector<64x224xf32>, vector<8x224xf32> -> vector<8x224xf32>
    %c0_3 = arith.constant 0 : index
    %c0_4 = arith.constant 0 : index
    %3 = vector.load %arg3[%c0_3, %c0_4] : memref<1x224xf32, #tpu.memory_space<vmem>>, vector<1x224xf32>
    %4 = vector.broadcast %3 : vector<1x224xf32> to vector<8x224xf32>
    %5 = arith.addf %2, %4 : vector<8x224xf32>
    %c0_5 = arith.constant 0 : index
    %c0_6 = arith.constant 0 : index
    %6 = vector.load %arg4[%c0_5, %c0_6] : memref<8x224xf32, #tpu.memory_space<vmem>>, vector<8x224xf32>
    tpu.vector_store %arg4[%c0_5, %c0_6], %5 {strides = array<i32>} : memref<8x224xf32, #tpu.memory_space<vmem>>, vector<8x224xf32>,
    return
  }
  func.func @transform_0(%arg0: i32) -> (i32, i32) {
    %c0_i32 = arith.constant 0 : i32
    %c0_i32_0 = arith.constant 0 : i32
    return %arg0, %c0_i32 : i32, i32
  }
  func.func @transform_1(%arg0: i32) -> (i32, i32) {
    %c0_i32 = arith.constant 0 : i32
    %c0_i32_0 = arith.constant 0 : i32
    %c0_i32_1 = arith.constant 0 : i32
    return %c0_i32, %c0_i32_0 : i32, i32
  }
  func.func @transform_2(%arg0: i32) -> (i32, i32) {
    %c0_i32 = arith.constant 0 : i32
    %c0_i32_0 = arith.constant 0 : i32
    %c0_i32_1 = arith.constant 0 : i32
    return %c0_i32, %c0_i32_0 : i32, i32
  }
  func.func @transform_3(%arg0: i32) -> (i32, i32) {
    %c0_i32 = arith.constant 0 : i32
    %c0_i32_0 = arith.constant 0 : i32
    return %arg0, %c0_i32 : i32, i32
  }
}

</mosaic_0001>

<llo_original>
// kernel: tpu_custom_call.1
$region0: #{tpu_custom_call.1}
  #allocation0 [shape = 'u32[]', space=smem, size = 0x4, offset = 0x4, fixed_abs, tag = 'smem constant byte address 0x4 - core index']
  #allocation1 [shape = 'u32[144,128]{1,0:T(1,128)}', space=vmem, size = 0x12000, scoped, tag = 'internal scratch']
  %s0 = inlined_call_operand.hbm [shape: f32[2,64], index: 0, kind: input, shape index: {}]
  %s1 = inlined_call_operand.hbm [shape: f32[64,224], index: 1, kind: input, shape index: {}]
  %s2 = inlined_call_operand.vmem [shape: f32[1,224], index: 2, kind: input, shape index: {}]
  %s3 = inlined_call_operand.hbm [shape: f32[2,224], index: 3, kind: output, shape index: {}]
  %s4 = sld [smem:[#allocation0]]
  $region30: #{tpu_custom_call.1} parent=0
    _
  %s6 = ssub.s32 1, %s4
  %s7 = scalar_select 0, %s6, %s4
  $region1: #{tpu_custom_call.1} parent=0
    #allocation2 [shape = 'u8[4096]{0}', space=vmem, size = 0x1000, scoped, tag = 'input window, operand 0, single buffered']
    #allocation3 [shape = 's32[1]{0}', space=sflag, size = 0x4, scoped, tag = 'scoped memory for tpu_custom_call.1']
    #allocation4 [shape = 's32[1]{0}', space=sflag, size = 0x4, scoped, tag = 'scoped memory for tpu_custom_call.1']
    #allocation5 [shape = 'u8[65536]{0}', space=vmem, size = 0x10000, scoped, tag = 'input window, operand 1, single buffered']
    #allocation6 [shape = 's32[1]{0}', space=sflag, size = 0x4, scoped, tag = 'scoped memory for tpu_custom_call.1']
    #allocation7 [shape = 'u8[8192]{0}', space=vmem, size = 0x2000, scoped, tag = 'output window, operand 0, single buffered']
    %8 = vsyncpa [#allocation3], 0
    %9 = vsyncpa [#allocation6], 0
    %10 = vsyncpa [#allocation4], 0
    // Predicated region
    $region2: #{tpu_custom_call.1} parent=1 // pred_check
      _
    $region3: #{tpu_custom_call.1} parent=1 // pred_check_branch
      %12 = sbr.rel (0) target = $region5
    $region4: #{tpu_custom_call.1} parent=1 // pred_region
      %s14 = ssub.s32 128, 32
      %15 = vsyncadd [#allocation3], %s14
      %s16 = sshll.u32 [#allocation2], 4
      %s17 = int_to_ptr.vmem [resolvable:$true] %s16
      %22 = dma.hbm_to_vmem [thread:$0]  %s0, 32, %s17, [#allocation3], 32, 32, 2
    $region5: #{tpu_custom_call.1} parent=1 // pred_fallthru
      _
    // Predicated region
    $region6: #{tpu_custom_call.1} parent=1 // pred_check
      _
    $region7: #{tpu_custom_call.1} parent=1 // pred_check_branch
      %24 = sbr.rel (0) target = $region9
    $region8: #{tpu_custom_call.1} parent=1 // pred_region
      %s26 = ssub.s32 2048, 2048
      %27 = vsyncadd [#allocation6], %s26
      %s28 = sshll.u32 [#allocation5], 4
      %s29 = int_to_ptr.vmem [resolvable:$true] %s28
      %34 = dma.hbm_to_vmem [thread:$0]  %s1, 2048, %s29, [#allocation6], 256, 256, 16
    $region9: #{tpu_custom_call.1} parent=1 // pred_fallthru
      _
    // Predicated region
    $region10: #{tpu_custom_call.1} parent=1 // pred_check
      _
    $region11: #{tpu_custom_call.1} parent=1 // pred_check_branch
      %36 = sbr.rel (0) target = $region13
    $region12: #{tpu_custom_call.1} parent=1 // pred_region
      _
    $region13: #{tpu_custom_call.1} parent=1 // pred_fallthru
      _
    // Predicated region
    $region14: #{tpu_custom_call.1} parent=1 // pred_check
      _
    $region15: #{tpu_custom_call.1} parent=1 // pred_check_branch
      %38 = sbr.rel (0) target = $region17
    $region16: #{tpu_custom_call.1} parent=1 // pred_region
      %39 = dma.done [#allocation3], 128
    $region17: #{tpu_custom_call.1} parent=1 // pred_fallthru
      _
    // Predicated region
    $region18: #{tpu_custom_call.1} parent=1 // pred_check
      _
    $region19: #{tpu_custom_call.1} parent=1 // pred_check_branch
      %41 = sbr.rel (0) target = $region21
    $region20: #{tpu_custom_call.1} parent=1 // pred_region
      %42 = dma.done [#allocation6], 2048
    $region21: #{tpu_custom_call.1} parent=1 // pred_fallthru
      _
    %v43 = vld [vmem:[#allocation2] sm:$0xff]
    %v44 = vld [vmem:[#allocation5] sm:$0xff]
    %v45 = vld [vmem:[#allocation5 + $0x8] sm:$0xff]
    %v46 = vld [vmem:[#allocation5 + $0x10] sm:$0xff]
    %v47 = vld [vmem:[#allocation5 + $0x18] sm:$0xff]
    %v48 = vld [vmem:[#allocation5 + $0x20] sm:$0xff]
    %v49 = vld [vmem:[#allocation5 + $0x28] sm:$0xff]
    %v50 = vld [vmem:[#allocation5 + $0x30] sm:$0xff]
    %v51 = vld [vmem:[#allocation5 + $0x38] sm:$0xff]
    %v52 = vld [vmem:[#allocation5 + $0x40] sm:$0xff]
    %v53 = vld [vmem:[#allocation5 + $0x48] sm:$0xff]
    %v54 = vld [vmem:[#allocation5 + $0x50] sm:$0xff]
    %v55 = vld [vmem:[#allocation5 + $0x58] sm:$0xff]
    %v56 = vld [vmem:[#allocation5 + $0x60] sm:$0xff]
    %v57 = vld [vmem:[#allocation5 + $0x68] sm:$0xff]
    %v58 = vld [vmem:[#allocation5 + $0x70] sm:$0xff]
    %v59 = vld [vmem:[#allocation5 + $0x78] sm:$0xff]
    %v60 = vld [vmem:[%s2] sm:$0x3]
    %v62 = vlaneseq
    %v63 = vshrl.u32 %v62, 7
    %v64 = vsub.s32 0, %v63
    %v65 = vrot.slane %v60, %v64
    %v66 = vlaneseq
    %v67 = vshrl.u32 %v66, 7
    %v68 = vsub.s32 1, %v67
    %v69 = vrot.slane %v60, %v68
    %vm72 = vcmask 523264
    %v74 = vsel %vm72, %v43, 0
    %76 = vmatprep.subr.mxu0 %v45
    %77 = vmatpush1.msra.mxu0 %v44
    %78 = vmatprep.subr.mxu0 %v47
    %79 = vmatpush1.msra.mxu0 %v46
    %80 = vmatprep.subr.mxu0 %v49
    %81 = vmatpush1.msra.mxu0 %v48
    %82 = vmatprep.subr.mxu0 %v51
    %83 = vmatpush1.msra.mxu0 %v50
    %84 = vmatprep.subr.mxu0 %v53
    %85 = vmatpush1.msra.mxu0 %v52
    %86 = vmatprep.subr.mxu0 %v55
    %87 = vmatpush1.msra.mxu0 %v54
    %88 = vmatprep.subr.mxu0 %v57
    %89 = vmatpush1.msra.mxu0 %v56
    %90 = vmatprep.subr.mxu0 %v59
    %91 = vmatpush1.msra.mxu0 %v58
    %92 = vmatprep.subr.mxu0 0.0
    %93 = vmatpush1.msra.mxu0 0.0
    %94 = vmatprep.subr.mxu0 0.0
    %95 = vmatpush1.msra.mxu0 0.0
    %96 = vmatprep.subr.mxu0 0.0
    %97 = vmatpush1.msra.mxu0 0.0
    %98 = vmatprep.subr.mxu0 0.0
    %99 = vmatpush1.msra.mxu0 0.0
    %100 = vmatprep.subr.mxu0 0.0
    %101 = vmatpush1.msra.mxu0 0.0
    %102 = vmatprep.subr.mxu0 0.0
    %103 = vmatpush1.msra.mxu0 0.0
    %104 = vmatprep.subr.mxu0 0.0
    %105 = vmatpush1.msra.mxu0 0.0
    %106 = vmatprep.subr.mxu0 0.0
    %107 = vmatpush1.msra.mxu0 0.0
    %108 = vmatprep.subr.mxu0 0.0
    %109 = vmatpush1.msra.mxu0 0.0
    %110 = vmatprep.subr.mxu0 0.0
    %111 = vmatpush1.msra.mxu0 0.0
    %112 = vmatprep.subr.mxu0 0.0
    %113 = vmatpush1.msra.mxu0 0.0
    %114 = vmatprep.subr.mxu0 0.0
    %115 = vmatpush1.msra.mxu0 0.0
    %116 = vmatprep.subr.mxu0 0.0
    %117 = vmatpush1.msra.mxu0 0.0
    %118 = vmatprep.subr.mxu0 0.0
    %119 = vmatpush1.msra.mxu0 0.0
    %120 = vmatprep.subr.mxu0 0.0
    %121 = vmatpush1.msra.mxu0 0.0
    %122 = vmatprep.subr.mxu0 0.0
    %123 = vmatpush1.msra.mxu0 0.0
    %124 = vmatprep.subr.mxu0 0.0
    %125 = vmatpush1.msra.mxu0 0.0
    %126 = vmatprep.subr.mxu0 0.0
    %127 = vmatpush1.msra.mxu0 0.0
    %128 = vmatprep.subr.mxu0 0.0
    %129 = vmatpush1.msra.mxu0 0.0
    %130 = vmatprep.subr.mxu0 0.0
    %131 = vmatpush1.msra.mxu0 0.0
    %132 = vmatprep.subr.mxu0 0.0
    %133 = vmatpush1.msra.mxu0 0.0
    %134 = vmatprep.subr.mxu0 0.0
    %135 = vmatpush1.msra.mxu0 0.0
    %136 = vmatprep.subr.mxu0 0.0
    %137 = vmatpush1.msra.mxu0 0.0
    %138 = vmatprep.subr.mxu0 0.0
    %139 = vmatpush1.msra.mxu0 0.0
    %140 = vmatprep.mubr.f32.mxu0 0.0
    %141 = vmatmul.mubr.f32.gmra.mrb[0].mxu0 %v74
    %v142 = vpop.f32.mrb[0].mxu0
    %v143 = vadd.f32 %v65, %v142
    %v144 = vpop.f32.mrb[0].mxu0
    %v145 = vadd.f32 %v69, %v144
    %146 = vdwg.mxu0
    %v149 = vcombine.low %v143, %v145
    %v150 = vcombine.high %v143, %v145
    %v152 = vunpack.c.l.s4 1983009808
    %v153 = vunpack.c.0.s8 %v152
    %v154 = vlaneseq
    %v155 = vshrl.u32 %v154, 7
    %v156 = vsub.s32 %v153, %v155
    %v157 = vrot.slane %v149, %v156
    %v159 = vunpack.c.l.s4 1983009808
    %v160 = vunpack.c.0.s8 %v159
    %v161 = vlaneseq
    %v162 = vshrl.u32 %v161, 7
    %v163 = vsub.s32 %v160, %v162
    %v164 = vrot.slane %v150, %v163
    %v165 = vcombine.high %v157, %v157
    %v166 = vcombine.high %v164, %v164
    %vm171 = vcmask 1041408
    %vm172 = vcmask 781314
    %vm173 = vmor %vm172, %vm171
    %174 = vst.msk [vmem:[#allocation7] sm:$0xf] %vm173, %v157
    %175 = vst.msk [vmem:[#allocation7 + $0x4] sm:$0xf] %vm173, %v165
    %176 = vst.msk [vmem:[#allocation7 + $0x8] sm:$0xf] %vm173, %v164
    %177 = vst.msk [vmem:[#allocation7 + $0xc] sm:$0xf] %vm173, %v166
    // Predicated region
    $region22: #{tpu_custom_call.1} parent=1 // pred_check
      _
    $region23: #{tpu_custom_call.1} parent=1 // pred_check_branch
      %179 = sbr.rel (0) target = $region25
    $region24: #{tpu_custom_call.1} parent=1 // pred_region
      %s181 = ssub.s32 256, 64
      %182 = vsyncadd [#allocation4], %s181
      %s183 = sshll.u32 [#allocation7], 4
      %s184 = int_to_ptr.vmem [resolvable:$true] %s183
      %189 = dma.vmem_to_hbm [thread:$0]  %s184, 64, %s3, [#allocation4], 64, 64, 4
    $region25: #{tpu_custom_call.1} parent=1 // pred_fallthru
      _
    // Predicated region
    $region26: #{tpu_custom_call.1} parent=1 // pred_check
      _
    $region27: #{tpu_custom_call.1} parent=1 // pred_check_branch
      %191 = sbr.rel (0) target = $region29
    $region28: #{tpu_custom_call.1} parent=1 // pred_region
      %192 = dma.done [#allocation4], 256
    $region29: #{tpu_custom_call.1} parent=1 // pred_fallthru
      _
    %193 = vsyncpa [#allocation3], 1
    %194 = vsyncpa [#allocation6], 1
    %195 = vsyncpa [#allocation4], 1

</llo_original>
